<compile_context>
chip_gen: v5e
topology: v5e:2x2
jax: 0.10.0
libtpu: 0.0.40
codegen_flags: <defaults>
</compile_context>

<pallas_src>
import functools

import jax
import jax.numpy as jnp
from jax.experimental import pallas as pl
from jax.experimental.pallas import tpu as pltpu

HIDDEN = 128
LANE = 128
SUBLANE_BF16 = 16


def _round_up(n, m):
    return (n + m - 1) // m * m


def _pick_tk(k_pad, max_tk=2048):
    """Largest multiple of 128 that divides k_pad and is <= max_tk."""
    units = k_pad // LANE
    max_units = max(1, min(units, max_tk // LANE))
    for d in range(max_units, 0, -1):
        if units % d == 0:
            return d * LANE
    return LANE


def mlp_kernel(x_ref, w1_ref, b1_ref, w2_ref, b2_ref, w3_ref, b3_ref,
               o_ref, acc_ref, *, tk):
    k = pl.program_id(1)

    # Fold the fc1 bias into the accumulator init (one broadcast per batch tile).
    @pl.when(k == 0)
    def _():
        acc_ref[...] = jnp.broadcast_to(b1_ref[...], acc_ref.shape)

    # fc1 partial product for this K tile: x already bf16, w1 is VMEM-resident
    # and sliced here (no per-batch-tile refetch); f32 MXU accumulation.
    k_off = pl.multiple_of(k * tk, LANE)
    w1_tile = w1_ref[pl.ds(k_off, tk), :]
    acc_ref[...] += jnp.dot(x_ref[...], w1_tile,
                            preferred_element_type=jnp.float32)

    # On the last K tile: finish fc1 (relu), then fc2 + relu and fc3 on the
    # VMEM-resident hidden tile, and emit one lane-dense output store.
    @pl.when(k == pl.num_programs(1) - 1)
    def _():
        h1 = jnp.maximum(acc_ref[...], 0.0).astype(jnp.bfloat16)
        h2 = jnp.dot(h1, w2_ref[...],
                     preferred_element_type=jnp.float32) + b2_ref[...]
        h2 = jnp.maximum(h2, 0.0).astype(jnp.bfloat16)
        o_ref[...] = jnp.dot(h2, w3_ref[...],
                             preferred_element_type=jnp.float32) + b3_ref[...]


def prepare_params(params):
    """One-time weight prep (pad + bf16 cast), hoisted out of the forward pass."""
    w1, b1, w2, b2, w3, b3 = params
    in_dim = w1.shape[0]
    out_dim = w3.shape[1]
    k_pad = _round_up(in_dim, LANE)          # pad K only to a 128 multiple
    out_pad = _round_up(out_dim, LANE)       # lane-dense output columns

    w1p = jnp.pad(w1, ((0, k_pad - in_dim), (0, 0))).astype(jnp.bfloat16)
    w2p = w2.astype(jnp.bfloat16)
    w3p = jnp.pad(w3, ((0, 0), (0, out_pad - out_dim))).astype(jnp.bfloat16)
    b1p = b1.astype(jnp.float32).reshape(1, HIDDEN)
    b2p = b2.astype(jnp.float32).reshape(1, HIDDEN)
    b3p = jnp.pad(b3.astype(jnp.float32).reshape(1, out_dim),
                  ((0, 0), (0, out_pad - out_dim)))
    return dict(w1=w1p, b1=b1p, w2=w2p, b2=b2p, w3=w3p, b3=b3p,
                in_dim=in_dim, out_dim=out_dim, k_pad=k_pad, out_pad=out_pad)


def basenet_forward(x, prepped):
    """x: (B, N, N) float32 -> (B, output_size) float32."""
    w1p, b1p = prepped["w1"], prepped["b1"]
    w2p, b2p = prepped["w2"], prepped["b2"]
    w3p, b3p = prepped["w3"], prepped["b3"]
    in_dim, out_dim = prepped["in_dim"], prepped["out_dim"]
    k_pad, out_pad = prepped["k_pad"], prepped["out_pad"]

    B = x.shape[0]
    x_flat = x.reshape(B, -1)                 # torch.flatten(x, 1)
    assert x_flat.shape[1] == in_dim

    # --- tile sizes ----------------------------------------------------------
    TK = _pick_tk(k_pad)                               # divides k_pad, <= 2048
    # ceil(B/2) so the "parallel" batch axis spans both v7x TensorCores for
    # medium batches; multiple of 16 for bf16 sublane packing; capped at 512.
    TB = min(512, _round_up(max(1, (B + 1) // 2), SUBLANE_BF16))
    B_pad = _round_up(B, TB)
    batch_tiles = B_pad // TB
    k_steps = k_pad // TK
    grid = (batch_tiles, k_steps)

    # Zero-pad x then cast to bf16 (pad already materializes a copy: cast is
    # free here and halves the kernel's dominant HBM read).
    xp = jnp.pad(x_flat, ((0, B_pad - B), (0, k_pad - in_dim))).astype(jnp.bfloat16)

    # Extra x buffering when the heavy fc2/fc3 epilogue lands on a short K loop.
    x_spec_kwargs = {}
    x_bufs = 2
    if k_steps <= 2 and batch_tiles >= 2:
        x_spec_kwargs["pipeline_mode"] = pl.Buffered(3)
        x_bufs = 3
    x_spec = pl.BlockSpec((TB, TK), lambda b, k: (b, k), **x_spec_kwargs)

    # --- VMEM budget (covers v5e 16 MiB scoped default, fits v7x 64 MiB/TC) ---
    vmem_bytes = (
        k_pad * HIDDEN * 2                       # resident w1 (bf16)
        + x_bufs * TB * TK * 2                   # x tiles (bf16)
        + 2 * TB * out_pad * 4                   # output tiles (f32)
        + TB * HIDDEN * 4                        # f32 accumulator
        + 2 * HIDDEN * HIDDEN * 2                # w2 (bf16)
        + 2 * HIDDEN * out_pad * 2               # w3 (bf16)
        + 2 * 4 * (HIDDEN + HIDDEN + out_pad)    # biases (f32)
    )
    vmem_limit = int(min(vmem_bytes + (8 << 20), 60 << 20))

    cost = pl.CostEstimate(
        flops=2 * B_pad * (k_pad * HIDDEN + HIDDEN * HIDDEN + HIDDEN * out_pad),
        transcendentals=0,
        bytes_accessed=(xp.size * 2 + w1p.size * 2 + w2p.size * 2 + w3p.size * 2
                        + (b1p.size + b2p.size + b3p.size) * 4
                        + B_pad * out_pad * 4),
    )

    out = pl.pallas_call(
        functools.partial(mlp_kernel, tk=TK),
        out_shape=jax.ShapeDtypeStruct((B_pad, out_pad), jnp.float32),
        grid_spec=pltpu.PrefetchScalarGridSpec(
            num_scalar_prefetch=0,
            grid=grid,
            in_specs=[
                x_spec,                                                   # x tile (bf16)
                pl.BlockSpec((k_pad, HIDDEN), lambda b, k: (0, 0)),       # w1 resident
                pl.BlockSpec((1, HIDDEN), lambda b, k: (0, 0)),           # b1
                pl.BlockSpec((HIDDEN, HIDDEN), lambda b, k: (0, 0)),      # w2
                pl.BlockSpec((1, HIDDEN), lambda b, k: (0, 0)),           # b2
                pl.BlockSpec((HIDDEN, out_pad), lambda b, k: (0, 0)),     # w3 (padded)
                pl.BlockSpec((1, out_pad), lambda b, k: (0, 0)),          # b3 (padded)
            ],
            out_specs=pl.BlockSpec((TB, out_pad), lambda b, k: (b, 0)),
            scratch_shapes=[pltpu.VMEM((TB, HIDDEN), jnp.float32)],       # fc1 acc
        ),
        compiler_params=pltpu.CompilerParams(
            dimension_semantics=("parallel", "arbitrary"),
            vmem_limit_bytes=vmem_limit),
        cost_estimate=cost,
    )(xp, w1p, b1p, w2p, b2p, w3p, b3p)

    # TODO(synk): downstream consumers that tolerate the padded (B_pad, 128)
    # buffer can use `out` directly and skip this slice copy.
    return out[:B, :out_dim]


def init_params(key, net_num_nodes, output_size):
    """Deterministic init matching BaseNet's layer shapes.

    PyTorch nn.Linear weight is (out, in); we store (in, out) for the kernel.
    Uniform(-1/sqrt(fan_in), 1/sqrt(fan_in)), same scheme as PyTorch default.
    """
    in_dim = net_num_nodes * net_num_nodes
    dims = [(in_dim, HIDDEN), (HIDDEN, HIDDEN), (HIDDEN, output_size)]
    params = []
    for (fan_in, fan_out) in dims:
        key, kw, kb = jax.random.split(key, 3)
        bound = 1.0 / jnp.sqrt(fan_in)
        w = jax.random.uniform(kw, (fan_in, fan_out), jnp.float32, -bound, bound)
        b = jax.random.uniform(kb, (1, fan_out), jnp.float32, -bound, bound)
        params += [w, b]
    return tuple(params)


def reference_bf16(x, params):
    """Plain-JAX reference with the same bf16-input / f32-accumulate path."""
    w1, b1, w2, b2, w3, b3 = params
    xf = x.reshape(x.shape[0], -1)
    h = jnp.dot(xf.astype(jnp.bfloat16), w1.astype(jnp.bfloat16),
                preferred_element_type=jnp.float32) + b1
    h = jnp.maximum(h, 0.0)
    h = jnp.dot(h.astype(jnp.bfloat16), w2.astype(jnp.bfloat16),
                preferred_element_type=jnp.float32) + b2
    h = jnp.maximum(h, 0.0)
    return jnp.dot(h.astype(jnp.bfloat16), w3.astype(jnp.bfloat16),
                   preferred_element_type=jnp.float32) + b3


if __name__ == "__main__":
    key = jax.random.PRNGKey(0)
    net_num_nodes = 8       # -> fc1 input = 64
    output_size = 4
    batch = 2

    kx, kp = jax.random.split(key)
    x = jax.random.normal(kx, (batch, net_num_nodes, net_num_nodes), jnp.float32)
    params = init_params(kp, net_num_nodes, output_size)
    prepped = prepare_params(params)          # one-time weight prep

    out = basenet_forward(x, prepped)
    jax.block_until_ready(out)
    assert out.shape == (batch, output_size)

    # Tight check against a reference using the same precision path.
    ref_bf16 = reference_bf16(x, params)
    assert jnp.allclose(out, ref_bf16, atol=1e-2, rtol=1e-2)

    # Loose sanity check against the pure-f32 PyTorch-equivalent math.
    w1, b1, w2, b2, w3, b3 = params
    xf = x.reshape(batch, -1)
    ref = jnp.maximum(xf @ w1 + b1, 0.0)
    ref = jnp.maximum(ref @ w2 + b2, 0.0)
    ref = ref @ w3 + b3
    assert jnp.allclose(out, ref, atol=5e-2, rtol=5e-2)

    print("KERNEL_OK")
</pallas_src>

<mosaic_0001>
module attributes {stable_mosaic.version = 11 : i64} {
  func.func @mlp_kernel(%arg0: i32, %arg1: i32, %arg2: memref<16x128xbf16, #tpu.memory_space<vmem>>, %arg3: memref<128x128xbf16, #tpu.memory_space<vmem>>, %arg4: memref<1x128xf32, #tpu.memory_space<vmem>>, %arg5: memref<128x128xbf16, #tpu.memory_space<vmem>>, %arg6: memref<1x128xf32, #tpu.memory_space<vmem>>, %arg7: memref<128x128xbf16, #tpu.memory_space<vmem>>, %arg8: memref<1x128xf32, #tpu.memory_space<vmem>>, %arg9: memref<16x128xf32, #tpu.memory_space<vmem>>, %arg10: memref<16x128xf32, #tpu.memory_space<vmem>>) attributes {dimension_semantics = [#tpu.dimension_semantics<parallel>, #tpu.dimension_semantics<arbitrary>], iteration_bounds = array<i64: 1, 1>, scalar_prefetch = 0 : i64, scratch_operands = 1 : i64, tpu.core_type = #tpu.core_type<tc>, window_params = [{transform_indices = @transform_0, window_bounds = array<i64: 16, 128>}, {pipeline_mode = #tpu.pipeline_mode<synchronous>, transform_indices = @transform_1, window_bounds = array<i64: 128, 128>}, {pipeline_mode = #tpu.pipeline_mode<synchronous>, transform_indices = @transform_2, window_bounds = array<i64: 1, 128>}, {pipeline_mode = #tpu.pipeline_mode<synchronous>, transform_indices = @transform_3, window_bounds = array<i64: 128, 128>}, {pipeline_mode = #tpu.pipeline_mode<synchronous>, transform_indices = @transform_4, window_bounds = array<i64: 1, 128>}, {pipeline_mode = #tpu.pipeline_mode<synchronous>, transform_indices = @transform_5, window_bounds = array<i64: 128, 128>}, {pipeline_mode = #tpu.pipeline_mode<synchronous>, transform_indices = @transform_6, window_bounds = array<i64: 1, 128>}, {transform_indices = @transform_7, window_bounds = array<i64: 16, 128>}]} {
    %c0_i32 = arith.constant 0 : i32
    %0 = arith.cmpi eq, %arg1, %c0_i32 : i32
    %1 = arith.extui %0 : i1 to i32
    %c0_i32_0 = arith.constant 0 : i32
    %2 = arith.cmpi ne, %1, %c0_i32_0 : i32
    scf.if %2 {
      %c0_9 = arith.constant 0 : index
      %c0_10 = arith.constant 0 : index
      %15 = vector.load %arg4[%c0_9, %c0_10] : memref<1x128xf32, #tpu.memory_space<vmem>>, vector<1x128xf32>
      %16 = vector.shape_cast %15 : vector<1x128xf32> to vector<1x128xf32>
      %17 = vector.broadcast %16 : vector<1x128xf32> to vector<16x128xf32>
      %c0_11 = arith.constant 0 : index
      %c0_12 = arith.constant 0 : index
      %18 = vector.load %arg10[%c0_11, %c0_12] : memref<16x128xf32, #tpu.memory_space<vmem>>, vector<16x128xf32>
      tpu.vector_store %arg10[%c0_11, %c0_12], %17 {strides = array<i32>} : memref<16x128xf32, #tpu.memory_space<vmem>>, vector<16x128xf32>,
    } else {
    }
    %c128_i32 = arith.constant 128 : i32
    %3 = arith.muli %arg1, %c128_i32 : i32
    %4 = tpu.assume_multiple %3, 128 : i32
    %5 = arith.index_cast %4 : i32 to index
    %c0 = arith.constant 0 : index
    %6 = vector.load %arg3[%5, %c0] : memref<128x128xbf16, #tpu.memory_space<vmem>>, vector<128x128xbf16>
    %c0_1 = arith.constant 0 : index
    %c0_2 = arith.constant 0 : index
    %7 = vector.load %arg10[%c0_1, %c0_2] : memref<16x128xf32, #tpu.memory_space<vmem>>, vector<16x128xf32>
    %c0_3 = arith.constant 0 : index
    %c0_4 = arith.constant 0 : index
    %8 = vector.load %arg2[%c0_3, %c0_4] : memref<16x128xbf16, #tpu.memory_space<vmem>>, vector<16x128xbf16>
    %cst = arith.constant dense<0.000000e+00> : vector<16x128xf32>
    %9 = tpu.matmul %8, %6, %cst {dimension_numbers = #tpu.dot_dimension_numbers<[1], [0], [0], [1], [0, 0, 1, 1], [], []>} : vector<16x128xbf16>, vector<128x128xbf16>, vector<16x128xf32> -> vector<16x128xf32>
    %10 = arith.addf %7, %9 : vector<16x128xf32>
    %c0_5 = arith.constant 0 : index
    %c0_6 = arith.constant 0 : index
    %11 = vector.load %arg10[%c0_5, %c0_6] : memref<16x128xf32, #tpu.memory_space<vmem>>, vector<16x128xf32>
    tpu.vector_store %arg10[%c0_5, %c0_6], %10 {strides = array<i32>} : memref<16x128xf32, #tpu.memory_space<vmem>>, vector<16x128xf32>,
    %c0_i32_7 = arith.constant 0 : i32
    %12 = arith.cmpi eq, %arg1, %c0_i32_7 : i32
    %13 = arith.extui %12 : i1 to i32
    %c0_i32_8 = arith.constant 0 : i32
    %14 = arith.cmpi ne, %13, %c0_i32_8 : i32
    scf.if %14 {
      %c0_9 = arith.constant 0 : index
      %c0_10 = arith.constant 0 : index
      %15 = vector.load %arg10[%c0_9, %c0_10] : memref<16x128xf32, #tpu.memory_space<vmem>>, vector<16x128xf32>
      %cst_11 = arith.constant 0.000000e+00 : f32
      %16 = vector.broadcast %cst_11 : f32 to vector<16x128xf32>
      %17 = arith.maximumf %15, %16 : vector<16x128xf32>
      %18 = arith.truncf %17 : vector<16x128xf32> to vector<16x128xbf16>
      %c0_12 = arith.constant 0 : index
      %c0_13 = arith.constant 0 : index
      %19 = vector.load %arg5[%c0_12, %c0_13] : memref<128x128xbf16, #tpu.memory_space<vmem>>, vector<128x128xbf16>
      %cst_14 = arith.constant dense<0.000000e+00> : vector<16x128xf32>
      %20 = tpu.matmul %18, %19, %cst_14 {dimension_numbers = #tpu.dot_dimension_numbers<[1], [0], [0], [1], [0, 0, 1, 1], [], []>} : vector<16x128xbf16>, vector<128x128xbf16>, vector<16x128xf32> -> vector<16x128xf32>
      %c0_15 = arith.constant 0 : index
      %c0_16 = arith.constant 0 : index
      %21 = vector.load %arg6[%c0_15, %c0_16] : memref<1x128xf32, #tpu.memory_space<vmem>>, vector<1x128xf32>
      %22 = vector.broadcast %21 : vector<1x128xf32> to vector<16x128xf32>
      %23 = arith.addf %20, %22 : vector<16x128xf32>
      %cst_17 = arith.constant 0.000000e+00 : f32
      %24 = vector.broadcast %cst_17 : f32 to vector<16x128xf32>
      %25 = arith.maximumf %23, %24 : vector<16x128xf32>
      %26 = arith.truncf %25 : vector<16x128xf32> to vector<16x128xbf16>
      %c0_18 = arith.constant 0 : index
      %c0_19 = arith.constant 0 : index
      %27 = vector.load %arg7[%c0_18, %c0_19] : memref<128x128xbf16, #tpu.memory_space<vmem>>, vector<128x128xbf16>
      %cst_20 = arith.constant dense<0.000000e+00> : vector<16x128xf32>
      %28 = tpu.matmul %26, %27, %cst_20 {dimension_numbers = #tpu.dot_dimension_numbers<[1], [0], [0], [1], [0, 0, 1, 1], [], []>} : vector<16x128xbf16>, vector<128x128xbf16>, vector<16x128xf32> -> vector<16x128xf32>
      %c0_21 = arith.constant 0 : index
      %c0_22 = arith.constant 0 : index
      %29 = vector.load %arg8[%c0_21, %c0_22] : memref<1x128xf32, #tpu.memory_space<vmem>>, vector<1x128xf32>
      %30 = vector.broadcast %29 : vector<1x128xf32> to vector<16x128xf32>
      %31 = arith.addf %28, %30 : vector<16x128xf32>
      %c0_23 = arith.constant 0 : index
      %c0_24 = arith.constant 0 : index
      %32 = vector.load %arg9[%c0_23, %c0_24] : memref<16x128xf32, #tpu.memory_space<vmem>>, vector<16x128xf32>
      tpu.vector_store %arg9[%c0_23, %c0_24], %31 {strides = array<i32>} : memref<16x128xf32, #tpu.memory_space<vmem>>, vector<16x128xf32>,
    } else {
    }
    return
  }
  func.func @transform_0(%arg0: i32, %arg1: i32) -> (i32, i32) {
    %c0_i32 = arith.constant 0 : i32
    return %arg0, %arg1 : i32, i32
  }
  func.func @transform_1(%arg0: i32, %arg1: i32) -> (i32, i32) {
    %c0_i32 = arith.constant 0 : i32
    %c0_i32_0 = arith.constant 0 : i32
    %c0_i32_1 = arith.constant 0 : i32
    return %c0_i32, %c0_i32_0 : i32, i32
  }
  func.func @transform_2(%arg0: i32, %arg1: i32) -> (i32, i32) {
    %c0_i32 = arith.constant 0 : i32
    %c0_i32_0 = arith.constant 0 : i32
    %c0_i32_1 = arith.constant 0 : i32
    return %c0_i32, %c0_i32_0 : i32, i32
  }
  func.func @transform_3(%arg0: i32, %arg1: i32) -> (i32, i32) {
    %c0_i32 = arith.constant 0 : i32
    %c0_i32_0 = arith.constant 0 : i32
    %c0_i32_1 = arith.constant 0 : i32
    return %c0_i32, %c0_i32_0 : i32, i32
  }
  func.func @transform_4(%arg0: i32, %arg1: i32) -> (i32, i32) {
    %c0_i32 = arith.constant 0 : i32
    %c0_i32_0 = arith.constant 0 : i32
    %c0_i32_1 = arith.constant 0 : i32
    return %c0_i32, %c0_i32_0 : i32, i32
  }
  func.func @transform_5(%arg0: i32, %arg1: i32) -> (i32, i32) {
    %c0_i32 = arith.constant 0 : i32
    %c0_i32_0 = arith.constant 0 : i32
    %c0_i32_1 = arith.constant 0 : i32
    return %c0_i32, %c0_i32_0 : i32, i32
  }
  func.func @transform_6(%arg0: i32, %arg1: i32) -> (i32, i32) {
    %c0_i32 = arith.constant 0 : i32
    %c0_i32_0 = arith.constant 0 : i32
    %c0_i32_1 = arith.constant 0 : i32
    return %c0_i32, %c0_i32_0 : i32, i32
  }
  func.func @transform_7(%arg0: i32, %arg1: i32) -> (i32, i32) {
    %c0_i32 = arith.constant 0 : i32
    %c0_i32_0 = arith.constant 0 : i32
    return %arg0, %c0_i32 : i32, i32
  }
}

</mosaic_0001>

<llo_original>
// kernel: tpu_custom_call.1
$region0: #{tpu_custom_call.1}
  #allocation0 [shape = 'u32[]', space=smem, size = 0x4, offset = 0x4, fixed_abs, tag = 'smem constant byte address 0x4 - core index']
  #allocation1 [shape = 'u32[72,128]{1,0:T(1,128)}', space=vmem, size = 0x9000, scoped, tag = 'internal scratch']
  #allocation2 [shape = 'f32[16,128]{1,0:T(8,128)}', space=vmem, size = 0x2000, scoped, tag = 'scratch operand']
  %s0 = inlined_call_operand.hbm [shape: bf16[16,128], index: 0, kind: input, shape index: {}]
  %s1 = inlined_call_operand.hbm [shape: bf16[128,128], index: 1, kind: input, shape index: {}]
  %s2 = inlined_call_operand.vmem [shape: f32[1,128], index: 2, kind: input, shape index: {}]
  %s3 = inlined_call_operand.hbm [shape: bf16[128,128], index: 3, kind: input, shape index: {}]
  %s4 = inlined_call_operand.vmem [shape: f32[1,128], index: 4, kind: input, shape index: {}]
  %s5 = inlined_call_operand.hbm [shape: bf16[128,128], index: 5, kind: input, shape index: {}]
  %s6 = inlined_call_operand.vmem [shape: f32[1,128], index: 6, kind: input, shape index: {}]
  %s7 = inlined_call_operand.hbm [shape: f32[16,128], index: 7, kind: output, shape index: {}]
  %s8 = sld [smem:[#allocation0]]
  $region62: #{tpu_custom_call.1} parent=0
    _
  %s10 = ssub.s32 1, %s8
  %s11 = scalar_select 0, %s10, %s8
  $region1: #{tpu_custom_call.1} parent=0
    #allocation3 [shape = 'u8[4096]{0}', space=vmem, size = 0x1000, scoped, tag = 'input window, operand 0, single buffered']
    #allocation4 [shape = 's32[1]{0}', space=sflag, size = 0x4, scoped, tag = 'scoped memory for tpu_custom_call.1']
    #allocation5 [shape = 's32[1]{0}', space=sflag, size = 0x4, scoped, tag = 'scoped memory for tpu_custom_call.1']
    #allocation6 [shape = 'u8[32768]{0}', space=vmem, size = 0x8000, scoped, tag = 'input window, operand 1, single buffered']
    #allocation7 [shape = 's32[1]{0}', space=sflag, size = 0x4, scoped, tag = 'scoped memory for tpu_custom_call.1']
    #allocation8 [shape = 'u8[32768]{0}', space=vmem, size = 0x8000, scoped, tag = 'input window, operand 3, single buffered']
    #allocation9 [shape = 'u8[32768]{0}', space=vmem, size = 0x8000, scoped, tag = 'input window, operand 5, single buffered']
    #allocation10 [shape = 's32[1]{0}', space=sflag, size = 0x4, scoped, tag = 'scoped memory for tpu_custom_call.1']
    #allocation11 [shape = 'u8[8192]{0}', space=vmem, size = 0x2000, scoped, tag = 'output window, operand 0, single buffered']
    %12 = vsyncpa [#allocation4], 0
    %13 = vsyncpa [#allocation7], 0
    %14 = vsyncpa [#allocation10], 0
    %15 = vsyncpa [#allocation5], 0
    // Predicated region
    $region2: #{tpu_custom_call.1} parent=1 // pred_check
      _
    $region3: #{tpu_custom_call.1} parent=1 // pred_check_branch
      %17 = sbr.rel (0) target = $region5
    $region4: #{tpu_custom_call.1} parent=1 // pred_region
      %19 = vsyncadd [#allocation4], 0
      %s20 = sshll.u32 %s0, 4
      %s21 = int_to_ptr.hbm [resolvable:$true] %s20
      %s22 = sshll.u32 [#allocation3], 4
      %s23 = int_to_ptr.vmem [resolvable:$true] %s22
      %28 = dma.hbm_to_vmem [thread:$0]  %s21, 128, %s23, [#allocation4], 64, 64, 4
    $region5: #{tpu_custom_call.1} parent=1 // pred_fallthru
      _
    // Predicated region
    $region6: #{tpu_custom_call.1} parent=1 // pred_check
      _
    $region7: #{tpu_custom_call.1} parent=1 // pred_check_branch
      %30 = sbr.rel (0) target = $region9
    $region8: #{tpu_custom_call.1} parent=1 // pred_region
      %32 = vsyncadd [#allocation7], 0
      %s33 = sshll.u32 %s1, 4
      %s34 = int_to_ptr.hbm [resolvable:$true] %s33
      %s35 = sshll.u32 [#allocation6], 4
      %s36 = int_to_ptr.vmem [resolvable:$true] %s35
      %41 = dma.hbm_to_vmem [thread:$0]  %s34, 1024, %s36, [#allocation7], 64, 64, 4
    $region9: #{tpu_custom_call.1} parent=1 // pred_fallthru
      _
    // Predicated region
    $region10: #{tpu_custom_call.1} parent=1 // pred_check
      _
    $region11: #{tpu_custom_call.1} parent=1 // pred_check_branch
      %43 = sbr.rel (0) target = $region13
    $region12: #{tpu_custom_call.1} parent=1 // pred_region
      _
    $region13: #{tpu_custom_call.1} parent=1 // pred_fallthru
      _
    // Predicated region
    $region14: #{tpu_custom_call.1} parent=1 // pred_check
      _
    $region15: #{tpu_custom_call.1} parent=1 // pred_check_branch
      %45 = sbr.rel (0) target = $region17
    $region16: #{tpu_custom_call.1} parent=1 // pred_region
      %47 = vsyncadd [#allocation7], 0
      %s48 = sshll.u32 %s3, 4
      %s49 = int_to_ptr.hbm [resolvable:$true] %s48
      %s50 = sshll.u32 [#allocation8], 4
      %s51 = int_to_ptr.vmem [resolvable:$true] %s50
      %56 = dma.hbm_to_vmem [thread:$0]  %s49, 1024, %s51, [#allocation7], 64, 64, 4
    $region17: #{tpu_custom_call.1} parent=1 // pred_fallthru
      _
    // Predicated region
    $region18: #{tpu_custom_call.1} parent=1 // pred_check
      _
    $region19: #{tpu_custom_call.1} parent=1 // pred_check_branch
      %58 = sbr.rel (0) target = $region21
    $region20: #{tpu_custom_call.1} parent=1 // pred_region
      _
    $region21: #{tpu_custom_call.1} parent=1 // pred_fallthru
      _
    // Predicated region
    $region22: #{tpu_custom_call.1} parent=1 // pred_check
      _
    $region23: #{tpu_custom_call.1} parent=1 // pred_check_branch
      %60 = sbr.rel (0) target = $region25
    $region24: #{tpu_custom_call.1} parent=1 // pred_region
      %62 = vsyncadd [#allocation10], 0
      %s63 = sshll.u32 %s5, 4
      %s64 = int_to_ptr.hbm [resolvable:$true] %s63
      %s65 = sshll.u32 [#allocation9], 4
      %s66 = int_to_ptr.vmem [resolvable:$true] %s65
      %71 = dma.hbm_to_vmem [thread:$0]  %s64, 1024, %s66, [#allocation10], 64, 64, 4
    $region25: #{tpu_custom_call.1} parent=1 // pred_fallthru
      _
    // Predicated region
    $region26: #{tpu_custom_call.1} parent=1 // pred_check
      _
    $region27: #{tpu_custom_call.1} parent=1 // pred_check_branch
      %73 = sbr.rel (0) target = $region29
    $region28: #{tpu_custom_call.1} parent=1 // pred_region
      _
    $region29: #{tpu_custom_call.1} parent=1 // pred_fallthru
      _
    // Predicated region
    $region30: #{tpu_custom_call.1} parent=1 // pred_check
      _
    $region31: #{tpu_custom_call.1} parent=1 // pred_check_branch
      %75 = sbr.rel (0) target = $region33
    $region32: #{tpu_custom_call.1} parent=1 // pred_region
      %77 = dma.done [#allocation4], 128
    $region33: #{tpu_custom_call.1} parent=1 // pred_fallthru
      _
    // Predicated region
    $region34: #{tpu_custom_call.1} parent=1 // pred_check
      _
    $region35: #{tpu_custom_call.1} parent=1 // pred_check_branch
      %79 = sbr.rel (0) target = $region37
    $region36: #{tpu_custom_call.1} parent=1 // pred_region
      %81 = dma.done [#allocation7], 1024
    $region37: #{tpu_custom_call.1} parent=1 // pred_fallthru
      _
    // Predicated region
    $region38: #{tpu_custom_call.1} parent=1 // pred_check
      _
    $region39: #{tpu_custom_call.1} parent=1 // pred_check_branch
      %83 = sbr.rel (0) target = $region41
    $region40: #{tpu_custom_call.1} parent=1 // pred_region
      %85 = dma.done [#allocation7], 1024
    $region41: #{tpu_custom_call.1} parent=1 // pred_fallthru
      _
    // Predicated region
    $region42: #{tpu_custom_call.1} parent=1 // pred_check
      _
    $region43: #{tpu_custom_call.1} parent=1 // pred_check_branch
      %87 = sbr.rel (0) target = $region45
    $region44: #{tpu_custom_call.1} parent=1 // pred_region
      %89 = dma.done [#allocation10], 1024
    $region45: #{tpu_custom_call.1} parent=1 // pred_fallthru
      _
    %p90 = scmp.eq.s32.totalorder 0, 0
    // Predicated region
    $region46: #{tpu_custom_call.1} parent=1 // pred_check
      %p91 = pneg %p90
    $region47: #{tpu_custom_call.1} parent=1 // pred_check_branch
      %93 = sbr.rel (%p91) target = $region49
    $region48: #{tpu_custom_call.1} parent=1 // pred_region
      %v94 = vld [vmem:[%s2] sm:$0x1]
      %v96 = vperm.slane %v94, 0
      %98 = vst [vmem:[#allocation2] sm:$0xff] %v96
      %99 = vst [vmem:[#allocation2 + $0x8] sm:$0xff] %v96
    $region49: #{tpu_custom_call.1} parent=1 // pred_fallthru
      _
    %s100 = smul.u32 0, 128
    %s101 = sshra.s32 %s100, 3
    %s102 = sand.u32 %s100, 7
    %s103 = smul.addr %s101, 4
    %s104 = scalar_lea.vmem [#allocation6], %s103
    %v105 = vld [vmem:[%s104] sm:$0xf]
    %v106 = vld [vmem:[%s104 + $0x4] sm:$0xf]
    %v107 = vld [vmem:[%s104 + $0x8] sm:$0xf]
    %v108 = vld [vmem:[%s104 + $0xc] sm:$0xf]
    %v109 = vld [vmem:[%s104 + $0x10] sm:$0xf]
    %v110 = vld [vmem:[%s104 + $0x14] sm:$0xf]
    %v111 = vld [vmem:[%s104 + $0x18] sm:$0xf]
    %v112 = vld [vmem:[%s104 + $0x1c] sm:$0xf]
    %v113 = vld [vmem:[%s104 + $0x20] sm:$0xf]
    %v114 = vld [vmem:[%s104 + $0x24] sm:$0xf]
    %v115 = vld [vmem:[%s104 + $0x28] sm:$0xf]
    %v116 = vld [vmem:[%s104 + $0x2c] sm:$0xf]
    %v117 = vld [vmem:[%s104 + $0x30] sm:$0xf]
    %v118 = vld [vmem:[%s104 + $0x34] sm:$0xf]
    %v119 = vld [vmem:[%s104 + $0x38] sm:$0xf]
    %v120 = vld [vmem:[%s104 + $0x3c] sm:$0xf]
    %v121 = vld [vmem:[#allocation2] sm:$0xff]
    %v122 = vld [vmem:[#allocation2 + $0x8] sm:$0xff]
    %v123 = vld [vmem:[#allocation3] sm:$0xf]
    %v124 = vld [vmem:[#allocation3 + $0x4] sm:$0xf]
    %v127 = vunpack.c.l.b16 %v123
    %v128 = vunpack.c.l.b16 %v124
    %v129 = vpack.c.b16 %v128, %v127
    %v147 = vunpack.c.l.b16 %v105
    %v148 = vunpack.c.l.b16 %v106
    %v149 = vunpack.c.l.b16 %v107
    %v150 = vunpack.c.l.b16 %v108
    %v151 = vunpack.c.l.b16 %v109
    %v152 = vunpack.c.l.b16 %v110
    %v153 = vunpack.c.l.b16 %v111
    %v154 = vunpack.c.l.b16 %v112
    %v155 = vunpack.c.l.b16 %v113
    %v156 = vunpack.c.l.b16 %v114
    %v157 = vunpack.c.l.b16 %v115
    %v158 = vunpack.c.l.b16 %v116
    %v159 = vunpack.c.l.b16 %v117
    %v160 = vunpack.c.l.b16 %v118
    %v161 = vunpack.c.l.b16 %v119
    %v162 = vunpack.c.l.b16 %v120
    %v163 = vpack.c.b16 %v148, %v147
    %v164 = vpack.c.b16 %v150, %v149
    %v165 = vpack.c.b16 %v152, %v151
    %v166 = vpack.c.b16 %v154, %v153
    %v167 = vpack.c.b16 %v156, %v155
    %v168 = vpack.c.b16 %v158, %v157
    %v169 = vpack.c.b16 %v160, %v159
    %v170 = vpack.c.b16 %v162, %v161
    %179 = vmatpush.bf16.msra.mxu0 %v170
    %180 = vmatpush.bf16.msra.mxu0 %v169
    %181 = vmatpush.bf16.msra.mxu0 %v168
    %182 = vmatpush.bf16.msra.mxu0 %v167
    %183 = vmatpush.bf16.msra.mxu0 %v166
    %184 = vmatpush.bf16.msra.mxu0 %v165
    %185 = vmatpush.bf16.msra.mxu0 %v164
    %186 = vmatpush.bf16.msra.mxu0 %v163
    %187 = vmatmul.bf16.gmra.mxu0 %v129
    %v188 = vpop.f32.mrf.mxu0
    %v189 = vadd.f32 0.0, %v188
    %v190 = vpop.f32.mrf.mxu0
    %v191 = vadd.f32 0.0, %v190
    %192 = vdwg.mxu0
    %v193 = vadd.f32 %v121, %v189
    %v194 = vadd.f32 %v122, %v191
    %195 = vst [vmem:[#allocation2] sm:$0xff] %v193
    %196 = vst [vmem:[#allocation2 + $0x8] sm:$0xff] %v194
    // Predicated region
    $region50: #{tpu_custom_call.1} parent=1 // pred_check
      %p197 = pneg %p90
    $region51: #{tpu_custom_call.1} parent=1 // pred_check_branch
      %199 = sbr.rel (%p197) target = $region53
    $region52: #{tpu_custom_call.1} parent=1 // pred_region
      %v200 = vld [vmem:[#allocation2] sm:$0xff]
      %v201 = vld [vmem:[#allocation2 + $0x8] sm:$0xff]
      %v202 = vmax.f32 %v200, 0.0
      %v203 = vmax.f32 %v201, 0.0
      %v204 = vpack.c.bf16 %v203, %v202
      %v205 = vld [vmem:[#allocation8] sm:$0xf]
      %v206 = vld [vmem:[#allocation8 + $0x4] sm:$0xf]
      %v207 = vld [vmem:[#allocation8 + $0x8] sm:$0xf]
      %v208 = vld [vmem:[#allocation8 + $0xc] sm:$0xf]
      %v209 = vld [vmem:[#allocation8 + $0x10] sm:$0xf]
      %v210 = vld [vmem:[#allocation8 + $0x14] sm:$0xf]
      %v211 = vld [vmem:[#allocation8 + $0x18] sm:$0xf]
      %v212 = vld [vmem:[#allocation8 + $0x1c] sm:$0xf]
      %v213 = vld [vmem:[#allocation8 + $0x20] sm:$0xf]
      %v214 = vld [vmem:[#allocation8 + $0x24] sm:$0xf]
      %v215 = vld [vmem:[#allocation8 + $0x28] sm:$0xf]
      %v216 = vld [vmem:[#allocation8 + $0x2c] sm:$0xf]
      %v217 = vld [vmem:[#allocation8 + $0x30] sm:$0xf]
      %v218 = vld [vmem:[#allocation8 + $0x34] sm:$0xf]
      %v219 = vld [vmem:[#allocation8 + $0x38] sm:$0xf]
      %v220 = vld [vmem:[#allocation8 + $0x3c] sm:$0xf]
      %v221 = vld [vmem:[%s4] sm:$0x1]
      %v223 = vperm.slane %v221, 0
      %v241 = vunpack.c.l.b16 %v205
      %v242 = vunpack.c.l.b16 %v206
      %v243 = vunpack.c.l.b16 %v207
      %v244 = vunpack.c.l.b16 %v208
      %v245 = vunpack.c.l.b16 %v209
      %v246 = vunpack.c.l.b16 %v210
      %v247 = vunpack.c.l.b16 %v211
      %v248 = vunpack.c.l.b16 %v212
      %v249 = vunpack.c.l.b16 %v213
      %v250 = vunpack.c.l.b16 %v214
      %v251 = vunpack.c.l.b16 %v215
      %v252 = vunpack.c.l.b16 %v216
      %v253 = vunpack.c.l.b16 %v217
      %v254 = vunpack.c.l.b16 %v218
      %v255 = vunpack.c.l.b16 %v219
      %v256 = vunpack.c.l.b16 %v220
      %v257 = vpack.c.b16 %v242, %v241
      %v258 = vpack.c.b16 %v244, %v243
      %v259 = vpack.c.b16 %v246, %v245
      %v260 = vpack.c.b16 %v248, %v247
      %v261 = vpack.c.b16 %v250, %v249
      %v262 = vpack.c.b16 %v252, %v251
      %v263 = vpack.c.b16 %v254, %v253
      %v264 = vpack.c.b16 %v256, %v255
      %273 = vmatpush.bf16.msra.mxu0 %v264
      %274 = vmatpush.bf16.msra.mxu0 %v263
      %275 = vmatpush.bf16.msra.mxu0 %v262
      %276 = vmatpush.bf16.msra.mxu0 %v261
      %277 = vmatpush.bf16.msra.mxu0 %v260
      %278 = vmatpush.bf16.msra.mxu0 %v259
      %279 = vmatpush.bf16.msra.mxu0 %v258
      %280 = vmatpush.bf16.msra.mxu0 %v257
      %281 = vmatmul.bf16.gmra.mxu0 %v204
      %v282 = vpop.f32.mrf.mxu0
      %v283 = vadd.f32 %v223, %v282
      %v284 = vpop.f32.mrf.mxu0
      %v285 = vadd.f32 %v223, %v284
      %286 = vdwg.mxu0
      %v287 = vmax.f32 %v283, 0.0
      %v288 = vmax.f32 %v285, 0.0
      %v289 = vpack.c.bf16 %v288, %v287
      %v290 = vld [vmem:[#allocation9] sm:$0xf]
      %v291 = vld [vmem:[#allocation9 + $0x4] sm:$0xf]
      %v292 = vld [vmem:[#allocation9 + $0x8] sm:$0xf]
      %v293 = vld [vmem:[#allocation9 + $0xc] sm:$0xf]
      %v294 = vld [vmem:[#allocation9 + $0x10] sm:$0xf]
      %v295 = vld [vmem:[#allocation9 + $0x14] sm:$0xf]
      %v296 = vld [vmem:[#allocation9 + $0x18] sm:$0xf]
      %v297 = vld [vmem:[#allocation9 + $0x1c] sm:$0xf]
      %v298 = vld [vmem:[#allocation9 + $0x20] sm:$0xf]
      %v299 = vld [vmem:[#allocation9 + $0x24] sm:$0xf]
      %v300 = vld [vmem:[#allocation9 + $0x28] sm:$0xf]
      %v301 = vld [vmem:[#allocation9 + $0x2c] sm:$0xf]
      %v302 = vld [vmem:[#allocation9 + $0x30] sm:$0xf]
      %v303 = vld [vmem:[#allocation9 + $0x34] sm:$0xf]
      %v304 = vld [vmem:[#allocation9 + $0x38] sm:$0xf]
      %v305 = vld [vmem:[#allocation9 + $0x3c] sm:$0xf]
      %v306 = vld [vmem:[%s6] sm:$0x1]
      %v308 = vperm.slane %v306, 0
      %v326 = vunpack.c.l.b16 %v290
      %v327 = vunpack.c.l.b16 %v291
      %v328 = vunpack.c.l.b16 %v292
      %v329 = vunpack.c.l.b16 %v293
      %v330 = vunpack.c.l.b16 %v294
      %v331 = vunpack.c.l.b16 %v295
      %v332 = vunpack.c.l.b16 %v296
      %v333 = vunpack.c.l.b16 %v297
      %v334 = vunpack.c.l.b16 %v298
      %v335 = vunpack.c.l.b16 %v299
      %v336 = vunpack.c.l.b16 %v300
      %v337 = vunpack.c.l.b16 %v301
      %v338 = vunpack.c.l.b16 %v302
      %v339 = vunpack.c.l.b16 %v303
      %v340 = vunpack.c.l.b16 %v304
      %v341 = vunpack.c.l.b16 %v305
      %v342 = vpack.c.b16 %v327, %v326
      %v343 = vpack.c.b16 %v329, %v328
      %v344 = vpack.c.b16 %v331, %v330
      %v345 = vpack.c.b16 %v333, %v332
      %v346 = vpack.c.b16 %v335, %v334
      %v347 = vpack.c.b16 %v337, %v336
      %v348 = vpack.c.b16 %v339, %v338
      %v349 = vpack.c.b16 %v341, %v340
      %358 = vmatpush.bf16.msra.mxu0 %v349
      %359 = vmatpush.bf16.msra.mxu0 %v348
      %360 = vmatpush.bf16.msra.mxu0 %v347
      %361 = vmatpush.bf16.msra.mxu0 %v346
      %362 = vmatpush.bf16.msra.mxu0 %v345
      %363 = vmatpush.bf16.msra.mxu0 %v344
      %364 = vmatpush.bf16.msra.mxu0 %v343
      %365 = vmatpush.bf16.msra.mxu0 %v342
      %366 = vmatmul.bf16.gmra.mxu0 %v289
      %v367 = vpop.f32.mrf.mxu0
      %v368 = vadd.f32 %v308, %v367
      %v369 = vpop.f32.mrf.mxu0
      %v370 = vadd.f32 %v308, %v369
      %371 = vdwg.mxu0
      %372 = vst [vmem:[#allocation11] sm:$0xff] %v368
      %373 = vst [vmem:[#allocation11 + $0x8] sm:$0xff] %v370
    $region53: #{tpu_custom_call.1} parent=1 // pred_fallthru
      _
    // Predicated region
    $region54: #{tpu_custom_call.1} parent=1 // pred_check
      _
    $region55: #{tpu_custom_call.1} parent=1 // pred_check_branch
      %375 = sbr.rel (0) target = $region57
    $region56: #{tpu_custom_call.1} parent=1 // pred_region
      %377 = vsyncadd [#allocation5], 0
      %s378 = sshll.u32 [#allocation11], 4
      %s379 = int_to_ptr.vmem [resolvable:$true] %s378
      %s380 = sshll.u32 %s7, 4
      %s381 = int_to_ptr.hbm [resolvable:$true] %s380
      %386 = dma.vmem_to_hbm [thread:$0]  %s379, 256, %s381, [#allocation5], 128, 128, 8
    $region57: #{tpu_custom_call.1} parent=1 // pred_fallthru
      _
    // Predicated region
    $region58: #{tpu_custom_call.1} parent=1 // pred_check
      _
    $region59: #{tpu_custom_call.1} parent=1 // pred_check_branch
      %388 = sbr.rel (0) target = $region61
    $region60: #{tpu_custom_call.1} parent=1 // pred_region
      %390 = dma.done [#allocation5], 256
    $region61: #{tpu_custom_call.1} parent=1 // pred_fallthru
      _
    %391 = vsyncpa [#allocation4], 1
    %392 = vsyncpa [#allocation7], 1
    %393 = vsyncpa [#allocation10], 1
    %394 = vsyncpa [#allocation5], 1

</llo_original>
